<compile_context>
chip_gen: v7x
topology: tpu7x:2x2x1
jax: 0.10.0
libtpu: 0.0.40
codegen_flags: <defaults>
</compile_context>

<pallas_src>
import jax
import jax.numpy as jnp
from jax import lax
from jax.experimental import pallas as pl
from jax.experimental.pallas import tpu as pltpu

EPS = 1e-5


def critic_head_kernel(x_ref, w1_ref, p1_ref, w2_ref, p2_ref, b3_ref, o_ref):
    n = x_ref.shape[0]
    inv_n = jnp.float32(1.0 / n)

    # Unpack the packed per-feature parameter slabs (all (1, F) rows, f32).
    b1, g1, be1 = p1_ref[0:1, :], p1_ref[1:2, :], p1_ref[2:3, :]
    b2, g2, be2, w3r = p2_ref[0:1, :], p2_ref[1:2, :], p2_ref[2:3, :], p2_ref[3:4, :]

    # ---- fc1 (bf16 MXU operands, f32 accumulate) + relu ----
    x = x_ref[...].astype(jnp.bfloat16)
    h1 = jnp.dot(x, w1_ref[...], preferred_element_type=jnp.float32) + b1
    h1 = jnp.maximum(h1, 0.0)

    # ---- bn1: single-pass batch stats + fused scale/shift (f32) ----
    mu1 = jnp.sum(h1, axis=0, keepdims=True) * inv_n
    m2_1 = jnp.sum(h1 * h1, axis=0, keepdims=True) * inv_n
    var1 = m2_1 - mu1 * mu1
    s1 = lax.rsqrt(var1 + EPS) * g1            # (1, 256)
    t1 = be1 - mu1 * s1                        # (1, 256)
    bn1 = h1 * s1 + t1                         # 2 VALU passes over (N, 256)

    # ---- fc2 (bf16 MXU operands, f32 accumulate) + relu ----
    h2 = jnp.dot(bn1.astype(jnp.bfloat16), w2_ref[...],
                 preferred_element_type=jnp.float32) + b2
    h2 = jnp.maximum(h2, 0.0)

    # ---- bn2 folded into fc3; fc3 as VPU multiply + XLU lane reduction ----
    mu2 = jnp.sum(h2, axis=0, keepdims=True) * inv_n
    m2_2 = jnp.sum(h2 * h2, axis=0, keepdims=True) * inv_n
    var2 = m2_2 - mu2 * mu2
    s2 = lax.rsqrt(var2 + EPS) * g2            # (1, 64)
    t2 = be2 - mu2 * s2                        # (1, 64)
    w3_eff = s2 * w3r                          # (1, 64)  scaled fc3 weight row
    b_eff = jnp.sum(t2 * w3r, axis=-1, keepdims=True) + b3_ref[0]   # (1, 1)

    out = jnp.sum(h2 * w3_eff, axis=-1, keepdims=True) + b_eff      # (N, 1)
    o_ref[...] = out.astype(o_ref.dtype)


def critic_head(x, params):
    w1, p1, w2, p2, b3 = params
    n = x.shape[0]
    vmem = pltpu.MemorySpace.VMEM
    smem = pltpu.MemorySpace.SMEM
    # Whole working set (<0.25 MiB) lives in VMEM on v5e/v6e/v7x -> no grid.
    # NOTE: BN couples all batch rows; a batch grid (e.g. for v7x dual-TC) would
    # need a cross-tile stats reduction, so it is intentionally not added.
    return pl.pallas_call(
        critic_head_kernel,
        out_shape=jax.ShapeDtypeStruct((n, 1), jnp.float32),
        in_specs=[
            pl.BlockSpec(memory_space=vmem),   # x           (N, in_features) f32
            pl.BlockSpec(memory_space=vmem),   # w1          (in_features, 256) bf16
            pl.BlockSpec(memory_space=vmem),   # [b1;g1;be1] (3, 256) f32
            pl.BlockSpec(memory_space=vmem),   # w2          (256, 64) bf16
            pl.BlockSpec(memory_space=vmem),   # [b2;g2;be2;w3^T] (4, 64) f32
            pl.BlockSpec(memory_space=smem),   # b3          (1,) f32 scalar
        ],
        out_specs=pl.BlockSpec(memory_space=vmem),
    )(x, w1, p1, w2, p2, b3)


def init_params(key, in_features):
    ks = jax.random.split(key, 10)

    def linear(kw, kb, fan_in, fan_out):
        bound = 1.0 / jnp.sqrt(fan_in)
        w = jax.random.uniform(kw, (fan_in, fan_out), jnp.float32, -bound, bound)
        b = jax.random.uniform(kb, (1, fan_out), jnp.float32, -bound, bound)
        return w, b

    w1, b1 = linear(ks[0], ks[1], in_features, 256)
    w2, b2 = linear(ks[2], ks[3], 256, 64)
    w3, b3 = linear(ks[4], ks[5], 64, 1)
    # BatchNorm affine params (default init gamma=1, beta=0; perturbed so the
    # affine path is exercised).
    g1 = 1.0 + 0.1 * jax.random.normal(ks[6], (1, 256), jnp.float32)
    be1 = 0.1 * jax.random.normal(ks[7], (1, 256), jnp.float32)
    g2 = 1.0 + 0.1 * jax.random.normal(ks[8], (1, 64), jnp.float32)
    be2 = 0.1 * jax.random.normal(ks[9], (1, 64), jnp.float32)

    # Packed layout: bf16 matmul weights (halves weight DMA; MXU is bf16-native),
    # one f32 slab of per-feature vectors per layer, b3 as an SMEM scalar.
    p1 = jnp.concatenate([b1, g1, be1], axis=0)         # (3, 256) f32
    p2 = jnp.concatenate([b2, g2, be2, w3.T], axis=0)   # (4, 64)  f32
    return (w1.astype(jnp.bfloat16), p1,
            w2.astype(jnp.bfloat16), p2,
            b3.reshape(1))


def _unpack(params):
    w1, p1, w2, p2, b3 = params
    return (w1.astype(jnp.float32), p1[0:1], p1[1:2], p1[2:3],
            w2.astype(jnp.float32), p2[0:1], p2[1:2], p2[2:3], p2[3:4],
            b3[0])


def _bn(h, g, be):
    mu = jnp.mean(h, axis=0, keepdims=True)
    var = jnp.mean((h - mu) ** 2, axis=0, keepdims=True)
    return (h - mu) / jnp.sqrt(var + EPS) * g + be


def critic_head_ref_f32(x, params):
    """Module-exact f32 reference (training-mode BN)."""
    w1, b1, g1, be1, w2, b2, g2, be2, w3r, b3 = _unpack(params)
    hi = lax.Precision.HIGHEST
    h = jnp.maximum(jnp.dot(x, w1, precision=hi) + b1, 0.0)
    h = _bn(h, g1, be1)
    h = jnp.maximum(jnp.dot(h, w2, precision=hi) + b2, 0.0)
    h = _bn(h, g2, be2)
    return jnp.sum(h * w3r, axis=-1, keepdims=True) + b3


def critic_head_ref_bf16(x, params):
    """Reference using the same bf16-MXU-operand precision the kernel uses."""
    w1, b1, g1, be1, w2, b2, g2, be2, w3r, b3 = _unpack(params)
    h = jnp.dot(x.astype(jnp.bfloat16), w1.astype(jnp.bfloat16),
                preferred_element_type=jnp.float32) + b1
    h = _bn(jnp.maximum(h, 0.0), g1, be1)
    h = jnp.dot(h.astype(jnp.bfloat16), w2.astype(jnp.bfloat16),
                preferred_element_type=jnp.float32) + b2
    h = _bn(jnp.maximum(h, 0.0), g2, be2)
    return jnp.sum(h * w3r, axis=-1, keepdims=True) + b3


if __name__ == "__main__":
    key = jax.random.PRNGKey(0)
    k_x, k_p = jax.random.split(key)

    batch = 64          # one call over the whole (small) batch; BN stats over all rows
    in_features = 32
    x = jax.random.normal(k_x, (batch, in_features), jnp.float32)
    params = init_params(k_p, in_features)

    out = jax.block_until_ready(critic_head(x, params))
    assert out.shape == (batch, 1), out.shape

    ref_bf16 = critic_head_ref_bf16(x, params)   # same precision as kernel
    ref_f32 = critic_head_ref_f32(x, params)     # module-exact f32 math

    assert jnp.allclose(out, ref_bf16, atol=2e-3, rtol=2e-3), \
        "mismatch vs bf16-matched reference"
    # bf16 MXU operands introduce ~1e-3 absolute error vs pure-f32 math.
    assert jnp.allclose(out, ref_f32, atol=5e-2, rtol=5e-2), \
        "mismatch vs f32 reference"
    print("KERNEL_OK")
</pallas_src>

<mosaic_0001>
module attributes {stable_mosaic.version = 11 : i64} {
  func.func @critic_head_kernel(%arg0: memref<64x32xf32, #tpu.memory_space<vmem>>, %arg1: memref<32x256xbf16, #tpu.memory_space<vmem>>, %arg2: memref<3x256xf32, #tpu.memory_space<vmem>>, %arg3: memref<256x64xbf16, #tpu.memory_space<vmem>>, %arg4: memref<4x64xf32, #tpu.memory_space<vmem>>, %arg5: memref<1xf32, #tpu.memory_space<smem>>, %arg6: memref<64x1xf32, #tpu.memory_space<vmem>>) attributes {dimension_semantics = [], scalar_prefetch = 0 : i64, scratch_operands = 0 : i64, tpu.core_type = #tpu.core_type<tc>} {
    %c0 = arith.constant 0 : index
    %c0_0 = arith.constant 0 : index
    %0 = vector.load %arg2[%c0, %c0_0] : memref<3x256xf32, #tpu.memory_space<vmem>>, vector<1x256xf32>
    %c1 = arith.constant 1 : index
    %c0_1 = arith.constant 0 : index
    %1 = vector.load %arg2[%c1, %c0_1] : memref<3x256xf32, #tpu.memory_space<vmem>>, vector<1x256xf32>
    %c2 = arith.constant 2 : index
    %c0_2 = arith.constant 0 : index
    %2 = vector.load %arg2[%c2, %c0_2] : memref<3x256xf32, #tpu.memory_space<vmem>>, vector<1x256xf32>
    %c0_3 = arith.constant 0 : index
    %c0_4 = arith.constant 0 : index
    %3 = vector.load %arg4[%c0_3, %c0_4] : memref<4x64xf32, #tpu.memory_space<vmem>>, vector<1x64xf32>
    %c1_5 = arith.constant 1 : index
    %c0_6 = arith.constant 0 : index
    %4 = vector.load %arg4[%c1_5, %c0_6] : memref<4x64xf32, #tpu.memory_space<vmem>>, vector<1x64xf32>
    %c2_7 = arith.constant 2 : index
    %c0_8 = arith.constant 0 : index
    %5 = vector.load %arg4[%c2_7, %c0_8] : memref<4x64xf32, #tpu.memory_space<vmem>>, vector<1x64xf32>
    %c3 = arith.constant 3 : index
    %c0_9 = arith.constant 0 : index
    %6 = vector.load %arg4[%c3, %c0_9] : memref<4x64xf32, #tpu.memory_space<vmem>>, vector<1x64xf32>
    %c0_10 = arith.constant 0 : index
    %c0_11 = arith.constant 0 : index
    %7 = vector.load %arg0[%c0_10, %c0_11] : memref<64x32xf32, #tpu.memory_space<vmem>>, vector<64x32xf32>
    %8 = arith.truncf %7 : vector<64x32xf32> to vector<64x32xbf16>
    %c0_12 = arith.constant 0 : index
    %c0_13 = arith.constant 0 : index
    %9 = vector.load %arg1[%c0_12, %c0_13] : memref<32x256xbf16, #tpu.memory_space<vmem>>, vector<32x256xbf16>
    %cst = arith.constant dense<0.000000e+00> : vector<64x256xf32>
    %10 = tpu.matmul %8, %9, %cst {dimension_numbers = #tpu.dot_dimension_numbers<[1], [0], [0], [1], [0, 0, 1, 1], [], []>} : vector<64x32xbf16>, vector<32x256xbf16>, vector<64x256xf32> -> vector<64x256xf32>
    %11 = vector.broadcast %0 : vector<1x256xf32> to vector<64x256xf32>
    %12 = arith.addf %10, %11 : vector<64x256xf32>
    %cst_14 = arith.constant 0.000000e+00 : f32
    %13 = vector.broadcast %cst_14 : f32 to vector<64x256xf32>
    %14 = arith.maximumf %12, %13 : vector<64x256xf32>
    %cst_15 = arith.constant dense<0.000000e+00> : vector<256xf32>
    %15 = vector.multi_reduction <add>, %14, %cst_15 [0] : vector<64x256xf32> to vector<256xf32>
    %16 = vector.shape_cast %15 : vector<256xf32> to vector<1x256xf32>
    %cst_16 = arith.constant 1.562500e-02 : f32
    %17 = vector.broadcast %cst_16 : f32 to vector<1x256xf32>
    %18 = arith.mulf %16, %17 : vector<1x256xf32>
    %19 = arith.mulf %14, %14 : vector<64x256xf32>
    %cst_17 = arith.constant dense<0.000000e+00> : vector<256xf32>
    %20 = vector.multi_reduction <add>, %19, %cst_17 [0] : vector<64x256xf32> to vector<256xf32>
    %21 = vector.shape_cast %20 : vector<256xf32> to vector<1x256xf32>
    %cst_18 = arith.constant 1.562500e-02 : f32
    %22 = vector.broadcast %cst_18 : f32 to vector<1x256xf32>
    %23 = arith.mulf %21, %22 : vector<1x256xf32>
    %24 = arith.mulf %18, %18 : vector<1x256xf32>
    %25 = arith.subf %23, %24 : vector<1x256xf32>
    %cst_19 = arith.constant 9.99999974E-6 : f32
    %26 = vector.broadcast %cst_19 : f32 to vector<1x256xf32>
    %27 = arith.addf %25, %26 : vector<1x256xf32>
    %28 = math.rsqrt %27 : vector<1x256xf32>
    %29 = arith.mulf %28, %1 : vector<1x256xf32>
    %30 = arith.mulf %18, %29 : vector<1x256xf32>
    %31 = arith.subf %2, %30 : vector<1x256xf32>
    %32 = vector.broadcast %29 : vector<1x256xf32> to vector<64x256xf32>
    %33 = arith.mulf %14, %32 : vector<64x256xf32>
    %34 = vector.broadcast %31 : vector<1x256xf32> to vector<64x256xf32>
    %35 = arith.addf %33, %34 : vector<64x256xf32>
    %36 = arith.truncf %35 : vector<64x256xf32> to vector<64x256xbf16>
    %c0_20 = arith.constant 0 : index
    %c0_21 = arith.constant 0 : index
    %37 = vector.load %arg3[%c0_20, %c0_21] : memref<256x64xbf16, #tpu.memory_space<vmem>>, vector<256x64xbf16>
    %cst_22 = arith.constant dense<0.000000e+00> : vector<64x64xf32>
    %38 = tpu.matmul %36, %37, %cst_22 {dimension_numbers = #tpu.dot_dimension_numbers<[1], [0], [0], [1], [0, 0, 1, 1], [], []>} : vector<64x256xbf16>, vector<256x64xbf16>, vector<64x64xf32> -> vector<64x64xf32>
    %39 = vector.broadcast %3 : vector<1x64xf32> to vector<64x64xf32>
    %40 = arith.addf %38, %39 : vector<64x64xf32>
    %cst_23 = arith.constant 0.000000e+00 : f32
    %41 = vector.broadcast %cst_23 : f32 to vector<64x64xf32>
    %42 = arith.maximumf %40, %41 : vector<64x64xf32>
    %cst_24 = arith.constant dense<0.000000e+00> : vector<64xf32>
    %43 = vector.multi_reduction <add>, %42, %cst_24 [0] : vector<64x64xf32> to vector<64xf32>
    %44 = vector.shape_cast %43 : vector<64xf32> to vector<1x64xf32>
    %cst_25 = arith.constant 1.562500e-02 : f32
    %45 = vector.broadcast %cst_25 : f32 to vector<1x64xf32>
    %46 = arith.mulf %44, %45 : vector<1x64xf32>
    %47 = arith.mulf %42, %42 : vector<64x64xf32>
    %cst_26 = arith.constant dense<0.000000e+00> : vector<64xf32>
    %48 = vector.multi_reduction <add>, %47, %cst_26 [0] : vector<64x64xf32> to vector<64xf32>
    %49 = vector.shape_cast %48 : vector<64xf32> to vector<1x64xf32>
    %cst_27 = arith.constant 1.562500e-02 : f32
    %50 = vector.broadcast %cst_27 : f32 to vector<1x64xf32>
    %51 = arith.mulf %49, %50 : vector<1x64xf32>
    %52 = arith.mulf %46, %46 : vector<1x64xf32>
    %53 = arith.subf %51, %52 : vector<1x64xf32>
    %cst_28 = arith.constant 9.99999974E-6 : f32
    %54 = vector.broadcast %cst_28 : f32 to vector<1x64xf32>
    %55 = arith.addf %53, %54 : vector<1x64xf32>
    %56 = math.rsqrt %55 : vector<1x64xf32>
    %57 = arith.mulf %56, %4 : vector<1x64xf32>
    %58 = arith.mulf %46, %57 : vector<1x64xf32>
    %59 = arith.subf %5, %58 : vector<1x64xf32>
    %60 = arith.mulf %57, %6 : vector<1x64xf32>
    %61 = arith.mulf %59, %6 : vector<1x64xf32>
    %cst_29 = arith.constant dense<0.000000e+00> : vector<1xf32>
    %62 = vector.multi_reduction <add>, %61, %cst_29 [1] : vector<1x64xf32> to vector<1xf32>
    %63 = vector.shape_cast %62 : vector<1xf32> to vector<1x1xf32>
    %c0_30 = arith.constant 0 : index
    %64 = memref.load %arg5[%c0_30] : memref<1xf32, #tpu.memory_space<smem>>
    %65 = vector.broadcast %64 : f32 to vector<1x1xf32>
    %66 = arith.addf %63, %65 : vector<1x1xf32>
    %67 = vector.broadcast %60 : vector<1x64xf32> to vector<64x64xf32>
    %68 = arith.mulf %42, %67 : vector<64x64xf32>
    %cst_31 = arith.constant dense<0.000000e+00> : vector<64xf32>
    %69 = vector.multi_reduction <add>, %68, %cst_31 [1] : vector<64x64xf32> to vector<64xf32>
    %70 = vector.shape_cast %69 : vector<64xf32> to vector<64x1xf32>
    %71 = vector.broadcast %66 : vector<1x1xf32> to vector<64x1xf32>
    %72 = arith.addf %70, %71 : vector<64x1xf32>
    %c0_32 = arith.constant 0 : index
    %c0_33 = arith.constant 0 : index
    %73 = vector.load %arg6[%c0_32, %c0_33] : memref<64x1xf32, #tpu.memory_space<vmem>>, vector<64x1xf32>
    tpu.vector_store %arg6[%c0_32, %c0_33], %72 {strides = array<i32>} : memref<64x1xf32, #tpu.memory_space<vmem>>, vector<64x1xf32>,
    return
  }
}

</mosaic_0001>

<llo_original>
// kernel: tpu_custom_call.1
$region0: #{tpu_custom_call.1}
  #allocation0 [shape = 'u32[]', space=smem, size = 0x4, offset = 0x4, fixed_abs, tag = 'smem constant byte address 0x4 - core index']
  #allocation1 [shape = 'u32[144,128]{1,0:T(1,128)}', space=vmem, size = 0x12000, scoped, tag = 'internal scratch']
  #allocation2 [shape = 'f32[1]{0:T(128)S(6)}', space=smem, size = 0x200, scoped, tag = 'scoped memory for tpu_custom_call.1']
  %s0 = inlined_call_operand.vmem [shape: f32[64,32], index: 0, kind: input, shape index: {}]
  %s1 = inlined_call_operand.vmem [shape: bf16[32,256], index: 1, kind: input, shape index: {}]
  %s2 = inlined_call_operand.vmem [shape: f32[3,256], index: 2, kind: input, shape index: {}]
  %s3 = inlined_call_operand.vmem [shape: bf16[256,64], index: 3, kind: input, shape index: {}]
  %s4 = inlined_call_operand.vmem [shape: f32[4,64], index: 4, kind: input, shape index: {}]
  %s5 = inlined_call_operand.<no memory space> [shape: f32[1], index: 5, kind: input, shape index: {}]
  %s6 = inlined_call_operand.vmem [shape: f32[64,1], index: 6, kind: output, shape index: {}]
  %s7 = sld [smem:[#allocation0]]
  $region34: #{tpu_custom_call.1} parent=0
    _
  %s9 = ssub.s32 1, %s7
  %s10 = scalar_select 0, %s9, %s7
  %11 = sst [smem:[#allocation2]] %s5
  // Predicated region
  $region2: #{tpu_custom_call.1} parent=0 // pred_check
    _
  $region3: #{tpu_custom_call.1} parent=0 // pred_check_branch
    %13 = sbr.rel (0) target = $region5
  $region4: #{tpu_custom_call.1} parent=0 // pred_region
    _
  $region5: #{tpu_custom_call.1} parent=0 // pred_fallthru
    _
  // Predicated region
  $region6: #{tpu_custom_call.1} parent=0 // pred_check
    _
  $region7: #{tpu_custom_call.1} parent=0 // pred_check_branch
    %15 = sbr.rel (0) target = $region9
  $region8: #{tpu_custom_call.1} parent=0 // pred_region
    _
  $region9: #{tpu_custom_call.1} parent=0 // pred_fallthru
    _
  // Predicated region
  $region10: #{tpu_custom_call.1} parent=0 // pred_check
    _
  $region11: #{tpu_custom_call.1} parent=0 // pred_check_branch
    %17 = sbr.rel (0) target = $region13
  $region12: #{tpu_custom_call.1} parent=0 // pred_region
    _
  $region13: #{tpu_custom_call.1} parent=0 // pred_fallthru
    _
  // Predicated region
  $region14: #{tpu_custom_call.1} parent=0 // pred_check
    _
  $region15: #{tpu_custom_call.1} parent=0 // pred_check_branch
    %19 = sbr.rel (0) target = $region17
  $region16: #{tpu_custom_call.1} parent=0 // pred_region
    _
  $region17: #{tpu_custom_call.1} parent=0 // pred_fallthru
    _
  // Predicated region
  $region18: #{tpu_custom_call.1} parent=0 // pred_check
    _
  $region19: #{tpu_custom_call.1} parent=0 // pred_check_branch
    %21 = sbr.rel (0) target = $region21
  $region20: #{tpu_custom_call.1} parent=0 // pred_region
    _
  $region21: #{tpu_custom_call.1} parent=0 // pred_fallthru
    _
  // Predicated region
  $region22: #{tpu_custom_call.1} parent=0 // pred_check
    _
  $region23: #{tpu_custom_call.1} parent=0 // pred_check_branch
    %23 = sbr.rel (0) target = $region25
  $region24: #{tpu_custom_call.1} parent=0 // pred_region
    _
  $region25: #{tpu_custom_call.1} parent=0 // pred_fallthru
    _
  %v25 = vld [vmem:[%s2] ss:$4 sm:$0x3]
  %s26 = scalar_lea.vmem %s2, 1
  %v27 = vld [vmem:[%s26] ss:$4 sm:$0x3]
  %s28 = scalar_lea.vmem %s2, 2
  %v29 = vld [vmem:[%s28] ss:$4 sm:$0x3]
  %v30 = vld [vmem:[%s4] sm:$0x1]
  %v31 = vld [vmem:[%s4 + $0x1] sm:$0x1]
  %v32 = vld [vmem:[%s4 + $0x2] sm:$0x1]
  %v33 = vld [vmem:[%s4 + $0x3] sm:$0x1]
  %v34 = vld [vmem:[%s0] sm:$0xff]
  %v35 = vld [vmem:[%s0 + $0x8] sm:$0xff]
  %v36 = vld [vmem:[%s0 + $0x10] sm:$0xff]
  %v37 = vld [vmem:[%s0 + $0x18] sm:$0xff]
  %v38 = vld [vmem:[%s0 + $0x20] sm:$0xff]
  %v39 = vld [vmem:[%s0 + $0x28] sm:$0xff]
  %v40 = vld [vmem:[%s0 + $0x30] sm:$0xff]
  %v41 = vld [vmem:[%s0 + $0x38] sm:$0xff]
  %v42 = vpack.c.bf16 %v35, %v34
  %v43 = vpack.c.bf16 %v37, %v36
  %v44 = vpack.c.bf16 %v39, %v38
  %v45 = vpack.c.bf16 %v41, %v40
  %v46 = vld [vmem:[%s1] sm:$0xff]
  %v47 = vld [vmem:[%s1 + $0x8] sm:$0xff]
  %v48 = vld [vmem:[%s1 + $0x10] sm:$0xff]
  %v49 = vld [vmem:[%s1 + $0x18] sm:$0xff]
  %v51 = vlaneseq
  %v52 = vshrl.u32 %v51, 7
  %v53 = vsub.s32 0, %v52
  %v54 = vrot.slane %v25, %v53
  %v55 = vlaneseq
  %v56 = vshrl.u32 %v55, 7
  %v57 = vsub.s32 1, %v56
  %v58 = vrot.slane %v25, %v57
  %v65 = vunpack.c.l.b16 %v46
  %v66 = vunpack.c.h.b16 %v46
  %v67 = vunpack.c.l.b16 %v47
  %v68 = vunpack.c.h.b16 %v47
  %v69 = vunpack.c.l.b16 %v48
  %v70 = vunpack.c.h.b16 %v48
  %v71 = vunpack.c.l.b16 %v49
  %v72 = vunpack.c.h.b16 %v49
  %v73 = vpack.c.b16 %v67, %v65
  %v74 = vpack.c.b16 %v68, %v66
  %v75 = vpack.c.b16 %v71, %v69
  %v76 = vpack.c.b16 %v72, %v70
  %vm81 = vcmask 261120
  %v83 = vsel %vm81, %v42, 0
  %v86 = vsel %vm81, %v43, 0
  %v89 = vsel %vm81, %v44, 0
  %v92 = vsel %vm81, %v45, 0
  %94 = vmatprep.subr.bf16.mxu0 %v74
  %95 = vmatpush1.bf16.msra.mxu0 %v73
  %96 = vmatprep.subr.bf16.mxu0 %v76
  %97 = vmatpush1.bf16.msra.mxu0 %v75
  %98 = vmatprep.subr.bf16.mxu0 0
  %99 = vmatpush1.bf16.msra.mxu0 0
  %100 = vmatprep.subr.bf16.mxu0 0
  %101 = vmatpush1.bf16.msra.mxu0 0
  %102 = vmatprep.subr.bf16.mxu0 0
  %103 = vmatpush1.bf16.msra.mxu0 0
  %104 = vmatprep.subr.bf16.mxu0 0
  %105 = vmatpush1.bf16.msra.mxu0 0
  %106 = vmatprep.subr.bf16.mxu0 0
  %107 = vmatpush1.bf16.msra.mxu0 0
  %108 = vmatprep.subr.bf16.mxu0 0
  %109 = vmatpush1.bf16.msra.mxu0 0
  %110 = vmatprep.subr.bf16.mxu0 0
  %111 = vmatpush1.bf16.msra.mxu0 0
  %112 = vmatprep.subr.bf16.mxu0 0
  %113 = vmatpush1.bf16.msra.mxu0 0
  %114 = vmatprep.subr.bf16.mxu0 0
  %115 = vmatpush1.bf16.msra.mxu0 0
  %116 = vmatprep.subr.bf16.mxu0 0
  %117 = vmatpush1.bf16.msra.mxu0 0
  %118 = vmatprep.subr.bf16.mxu0 0
  %119 = vmatpush1.bf16.msra.mxu0 0
  %120 = vmatprep.subr.bf16.mxu0 0
  %121 = vmatpush1.bf16.msra.mxu0 0
  %122 = vmatprep.subr.bf16.mxu0 0
  %123 = vmatpush1.bf16.msra.mxu0 0
  %124 = vmatprep.subr.bf16.mxu0 0
  %125 = vmatpush1.bf16.msra.mxu0 0
  %126 = vmatprep.mubr.bf16.mxu0 0
  %127 = vmatmul.mubr.bf16.gmra.mrb[0].mxu0 %v83
  %v128 = vpop.f32.mrb[0].mxu0
  %v129 = vadd.f32 %v54, %v128
  %v130 = vpop.f32.mrb[0].mxu0
  %v131 = vadd.f32 %v58, %v130
  %v132 = vpop.f32.mrb[0].mxu0
  %v133 = vadd.f32 %v54, %v132
  %v134 = vpop.f32.mrb[0].mxu0
  %v135 = vadd.f32 %v58, %v134
  %136 = vmatprep.mubr.bf16.mxu0 0
  %137 = vmatmul.mubr.bf16.gmra.mrb[0].mxu0 %v86
  %v138 = vpop.f32.mrb[0].mxu0
  %v139 = vadd.f32 %v54, %v138
  %v140 = vpop.f32.mrb[0].mxu0
  %v141 = vadd.f32 %v58, %v140
  %v142 = vpop.f32.mrb[0].mxu0
  %v143 = vadd.f32 %v54, %v142
  %v144 = vpop.f32.mrb[0].mxu0
  %v145 = vadd.f32 %v58, %v144
  %146 = vmatprep.mubr.bf16.mxu0 0
  %147 = vmatmul.mubr.bf16.gmra.mrb[0].mxu0 %v89
  %v148 = vpop.f32.mrb[0].mxu0
  %v149 = vadd.f32 %v54, %v148
  %v150 = vpop.f32.mrb[0].mxu0
  %v151 = vadd.f32 %v58, %v150
  %v152 = vpop.f32.mrb[0].mxu0
  %v153 = vadd.f32 %v54, %v152
  %v154 = vpop.f32.mrb[0].mxu0
  %v155 = vadd.f32 %v58, %v154
  %156 = vmatprep.mubr.bf16.mxu0 0
  %157 = vmatmul.mubr.bf16.gmra.mrb[0].mxu0 %v92
  %v158 = vpop.f32.mrb[0].mxu0
  %v159 = vadd.f32 %v54, %v158
  %v160 = vpop.f32.mrb[0].mxu0
  %v161 = vadd.f32 %v58, %v160
  %v162 = vpop.f32.mrb[0].mxu0
  %v163 = vadd.f32 %v54, %v162
  %v164 = vpop.f32.mrb[0].mxu0
  %v165 = vadd.f32 %v58, %v164
  %166 = vdwg.mxu0
  %v167 = vmax.f32 %v129, 0.0
  %v168 = vmax.f32 %v131, 0.0
  %v169 = vmax.f32 %v133, 0.0
  %v170 = vmax.f32 %v135, 0.0
  %v171 = vmax.f32 %v139, 0.0
  %v172 = vmax.f32 %v141, 0.0
  %v173 = vmax.f32 %v143, 0.0
  %v174 = vmax.f32 %v145, 0.0
  %v175 = vmax.f32 %v149, 0.0
  %v176 = vmax.f32 %v151, 0.0
  %v177 = vmax.f32 %v153, 0.0
  %v178 = vmax.f32 %v155, 0.0
  %v179 = vmax.f32 %v159, 0.0
  %v180 = vmax.f32 %v161, 0.0
  %v181 = vmax.f32 %v163, 0.0
  %v182 = vmax.f32 %v165, 0.0
  %v183 = vadd.f32 %v167, %v169
  %v184 = vadd.f32 %v183, %v171
  %v185 = vadd.f32 %v184, %v173
  %v186 = vadd.f32 %v185, %v175
  %v187 = vadd.f32 %v186, %v177
  %v188 = vadd.f32 %v187, %v179
  %v189 = vadd.f32 %v188, %v181
  %v190 = vrot.slane %v189, 4
  %v191 = vadd.f32 %v189, %v190
  %v192 = vrot.slane %v191, 2
  %v193 = vadd.f32 %v191, %v192
  %v194 = vrot.slane %v193, 1
  %v195 = vadd.f32 %v193, %v194
  %v196 = vadd.f32 %v168, %v170
  %v197 = vadd.f32 %v196, %v172
  %v198 = vadd.f32 %v197, %v174
  %v199 = vadd.f32 %v198, %v176
  %v200 = vadd.f32 %v199, %v178
  %v201 = vadd.f32 %v200, %v180
  %v202 = vadd.f32 %v201, %v182
  %v203 = vrot.slane %v202, 4
  %v204 = vadd.f32 %v202, %v203
  %v205 = vrot.slane %v204, 2
  %v206 = vadd.f32 %v204, %v205
  %v207 = vrot.slane %v206, 1
  %v208 = vadd.f32 %v206, %v207
  %v209 = vmul.f32 %v195, 0.015625
  %v210 = vmul.f32 %v208, 0.015625
  %v211 = vmul.f32 %v167, %v167
  %v212 = vmul.f32 %v168, %v168
  %v213 = vmul.f32 %v169, %v169
  %v214 = vmul.f32 %v170, %v170
  %v215 = vmul.f32 %v171, %v171
  %v216 = vmul.f32 %v172, %v172
  %v217 = vmul.f32 %v173, %v173
  %v218 = vmul.f32 %v174, %v174
  %v219 = vmul.f32 %v175, %v175
  %v220 = vmul.f32 %v176, %v176
  %v221 = vmul.f32 %v177, %v177
  %v222 = vmul.f32 %v178, %v178
  %v223 = vmul.f32 %v179, %v179
  %v224 = vmul.f32 %v180, %v180
  %v225 = vmul.f32 %v181, %v181
  %v226 = vmul.f32 %v182, %v182
  %v227 = vadd.f32 %v211, %v213
  %v228 = vadd.f32 %v227, %v215
  %v229 = vadd.f32 %v228, %v217
  %v230 = vadd.f32 %v229, %v219
  %v231 = vadd.f32 %v230, %v221
  %v232 = vadd.f32 %v231, %v223
  %v233 = vadd.f32 %v232, %v225
  %v234 = vrot.slane %v233, 4
  %v235 = vadd.f32 %v233, %v234
  %v236 = vrot.slane %v235, 2
  %v237 = vadd.f32 %v235, %v236
  %v238 = vrot.slane %v237, 1
  %v239 = vadd.f32 %v237, %v238
  %v240 = vadd.f32 %v212, %v214
  %v241 = vadd.f32 %v240, %v216
  %v242 = vadd.f32 %v241, %v218
  %v243 = vadd.f32 %v242, %v220
  %v244 = vadd.f32 %v243, %v222
  %v245 = vadd.f32 %v244, %v224
  %v246 = vadd.f32 %v245, %v226
  %v247 = vrot.slane %v246, 4
  %v248 = vadd.f32 %v246, %v247
  %v249 = vrot.slane %v248, 2
  %v250 = vadd.f32 %v248, %v249
  %v251 = vrot.slane %v250, 1
  %v252 = vadd.f32 %v250, %v251
  %v253 = vmul.f32 %v239, 0.015625
  %v254 = vmul.f32 %v252, 0.015625
  %v255 = vmul.f32 %v209, %v209
  %v256 = vmul.f32 %v210, %v210
  %v257 = vsub.f32 %v253, %v255
  %v258 = vsub.f32 %v254, %v256
  %v259 = vadd.f32 %v257, 1e-05
  %v260 = vadd.f32 %v258, 1e-05
  %v261 = vrsqrt.pop %v259
  %v262 = vrsqrt.pop %v260
  %v264 = vlaneseq
  %v265 = vshrl.u32 %v264, 7
  %v266 = vsub.s32 0, %v265
  %v267 = vrot.slane %v27, %v266
  %v268 = vlaneseq
  %v269 = vshrl.u32 %v268, 7
  %v270 = vsub.s32 1, %v269
  %v271 = vrot.slane %v27, %v270
  %v274 = vmul.f32 %v261, %v267
  %v275 = vmul.f32 %v262, %v271
  %v276 = vmul.f32 %v209, %v274
  %v277 = vmul.f32 %v210, %v275
  %v280 = vcombine.low %v276, %v277
  %v282 = vunpack.c.l.s4 1966171168
  %v283 = vunpack.c.0.s8 %v282
  %v284 = vlaneseq
  %v285 = vshrl.u32 %v284, 7
  %v286 = vsub.s32 %v283, %v285
  %v287 = vrot.slane %v280, %v286
  %v289 = vunpack.c.l.s4 1966171168
  %v290 = vunpack.c.0.s8 %v289
  %v291 = vlaneseq
  %v292 = vshrl.u32 %v291, 7
  %v293 = vsub.s32 %v290, %v292
  %v294 = vrot.slane %v287, %v293
  %v296 = vsub.f32 %v29, %v294
  %v297 = vlaneseq
  %v298 = vshrl.u32 %v297, 7
  %v299 = vsub.s32 0, %v298
  %v300 = vrot.slane %v274, %v299
  %v301 = vlaneseq
  %v302 = vshrl.u32 %v301, 7
  %v303 = vsub.s32 0, %v302
  %v304 = vrot.slane %v275, %v303
  %v305 = vmul.f32 %v167, %v300
  %v306 = vmul.f32 %v168, %v304
  %v307 = vmul.f32 %v169, %v300
  %v308 = vmul.f32 %v170, %v304
  %v309 = vmul.f32 %v171, %v300
  %v310 = vmul.f32 %v172, %v304
  %v311 = vmul.f32 %v173, %v300
  %v312 = vmul.f32 %v174, %v304
  %v313 = vmul.f32 %v175, %v300
  %v314 = vmul.f32 %v176, %v304
  %v315 = vmul.f32 %v177, %v300
  %v316 = vmul.f32 %v178, %v304
  %v317 = vmul.f32 %v179, %v300
  %v318 = vmul.f32 %v180, %v304
  %v319 = vmul.f32 %v181, %v300
  %v320 = vmul.f32 %v182, %v304
  %v322 = vlaneseq
  %v323 = vshrl.u32 %v322, 7
  %v324 = vsub.s32 0, %v323
  %v325 = vrot.slane %v296, %v324
  %v326 = vlaneseq
  %v327 = vshrl.u32 %v326, 7
  %v328 = vsub.s32 1, %v327
  %v329 = vrot.slane %v296, %v328
  %v332 = vadd.f32 %v305, %v325
  %v333 = vadd.f32 %v306, %v329
  %v334 = vadd.f32 %v307, %v325
  %v335 = vadd.f32 %v308, %v329
  %v336 = vadd.f32 %v309, %v325
  %v337 = vadd.f32 %v310, %v329
  %v338 = vadd.f32 %v311, %v325
  %v339 = vadd.f32 %v312, %v329
  %v340 = vadd.f32 %v313, %v325
  %v341 = vadd.f32 %v314, %v329
  %v342 = vadd.f32 %v315, %v325
  %v343 = vadd.f32 %v316, %v329
  %v344 = vadd.f32 %v317, %v325
  %v345 = vadd.f32 %v318, %v329
  %v346 = vadd.f32 %v319, %v325
  %v347 = vadd.f32 %v320, %v329
  %v348 = vpack.c.bf16 %v334, %v332
  %v349 = vpack.c.bf16 %v335, %v333
  %v350 = vpack.c.bf16 %v338, %v336
  %v351 = vpack.c.bf16 %v339, %v337
  %v352 = vpack.c.bf16 %v342, %v340
  %v353 = vpack.c.bf16 %v343, %v341
  %v354 = vpack.c.bf16 %v346, %v344
  %v355 = vpack.c.bf16 %v347, %v345
  %v356 = vld [vmem:[%s3] sm:$0xf]
  %v357 = vld [vmem:[%s3 + $0x4] sm:$0xf]
  %v358 = vld [vmem:[%s3 + $0x8] sm:$0xf]
  %v359 = vld [vmem:[%s3 + $0xc] sm:$0xf]
  %v360 = vld [vmem:[%s3 + $0x10] sm:$0xf]
  %v361 = vld [vmem:[%s3 + $0x14] sm:$0xf]
  %v362 = vld [vmem:[%s3 + $0x18] sm:$0xf]
  %v363 = vld [vmem:[%s3 + $0x1c] sm:$0xf]
  %v364 = vld [vmem:[%s3 + $0x20] sm:$0xf]
  %v365 = vld [vmem:[%s3 + $0x24] sm:$0xf]
  %v366 = vld [vmem:[%s3 + $0x28] sm:$0xf]
  %v367 = vld [vmem:[%s3 + $0x2c] sm:$0xf]
  %v368 = vld [vmem:[%s3 + $0x30] sm:$0xf]
  %v369 = vld [vmem:[%s3 + $0x34] sm:$0xf]
  %v370 = vld [vmem:[%s3 + $0x38] sm:$0xf]
  %v371 = vld [vmem:[%s3 + $0x3c] sm:$0xf]
  %v372 = vld [vmem:[%s3 + $0x40] sm:$0xf]
  %v373 = vld [vmem:[%s3 + $0x44] sm:$0xf]
  %v374 = vld [vmem:[%s3 + $0x48] sm:$0xf]
  %v375 = vld [vmem:[%s3 + $0x4c] sm:$0xf]
  %v376 = vld [vmem:[%s3 + $0x50] sm:$0xf]
  %v377 = vld [vmem:[%s3 + $0x54] sm:$0xf]
  %v378 = vld [vmem:[%s3 + $0x58] sm:$0xf]
  %v379 = vld [vmem:[%s3 + $0x5c] sm:$0xf]
  %v380 = vld [vmem:[%s3 + $0x60] sm:$0xf]
  %v381 = vld [vmem:[%s3 + $0x64] sm:$0xf]
  %v382 = vld [vmem:[%s3 + $0x68] sm:$0xf]
  %v383 = vld [vmem:[%s3 + $0x6c] sm:$0xf]
  %v384 = vld [vmem:[%s3 + $0x70] sm:$0xf]
  %v385 = vld [vmem:[%s3 + $0x74] sm:$0xf]
  %v386 = vld [vmem:[%s3 + $0x78] sm:$0xf]
  %v387 = vld [vmem:[%s3 + $0x7c] sm:$0xf]
  %v388 = vlaneseq
  %v389 = vshrl.u32 %v388, 7
  %v390 = vsub.s32 0, %v389
  %v391 = vrot.slane %v30, %v390
  %v424 = vunpack.c.l.b16 %v356
  %v425 = vunpack.c.l.b16 %v357
  %v426 = vunpack.c.l.b16 %v358
  %v427 = vunpack.c.l.b16 %v359
  %v428 = vunpack.c.l.b16 %v360
  %v429 = vunpack.c.l.b16 %v361
  %v430 = vunpack.c.l.b16 %v362
  %v431 = vunpack.c.l.b16 %v363
  %v432 = vunpack.c.l.b16 %v364
  %v433 = vunpack.c.l.b16 %v365
  %v434 = vunpack.c.l.b16 %v366
  %v435 = vunpack.c.l.b16 %v367
  %v436 = vunpack.c.l.b16 %v368
  %v437 = vunpack.c.l.b16 %v369
  %v438 = vunpack.c.l.b16 %v370
  %v439 = vunpack.c.l.b16 %v371
  %v440 = vunpack.c.l.b16 %v372
  %v441 = vunpack.c.l.b16 %v373
  %v442 = vunpack.c.l.b16 %v374
  %v443 = vunpack.c.l.b16 %v375
  %v444 = vunpack.c.l.b16 %v376
  %v445 = vunpack.c.l.b16 %v377
  %v446 = vunpack.c.l.b16 %v378
  %v447 = vunpack.c.l.b16 %v379
  %v448 = vunpack.c.l.b16 %v380
  %v449 = vunpack.c.l.b16 %v381
  %v450 = vunpack.c.l.b16 %v382
  %v451 = vunpack.c.l.b16 %v383
  %v452 = vunpack.c.l.b16 %v384
  %v453 = vunpack.c.l.b16 %v385
  %v454 = vunpack.c.l.b16 %v386
  %v455 = vunpack.c.l.b16 %v387
  %v456 = vpack.c.b16 %v425, %v424
  %v457 = vpack.c.b16 %v427, %v426
  %v458 = vpack.c.b16 %v429, %v428
  %v459 = vpack.c.b16 %v431, %v430
  %v460 = vpack.c.b16 %v433, %v432
  %v461 = vpack.c.b16 %v435, %v434
  %v462 = vpack.c.b16 %v437, %v436
  %v463 = vpack.c.b16 %v439, %v438
  %v464 = vpack.c.b16 %v441, %v440
  %v465 = vpack.c.b16 %v443, %v442
  %v466 = vpack.c.b16 %v445, %v444
  %v467 = vpack.c.b16 %v447, %v446
  %v468 = vpack.c.b16 %v449, %v448
  %v469 = vpack.c.b16 %v451, %v450
  %v470 = vpack.c.b16 %v453, %v452
  %v471 = vpack.c.b16 %v455, %v454
  %488 = vmatprep.subr.bf16.mxu0 0
  %489 = vmatpush1.bf16.msra.mxu0 %v456
  %490 = vmatprep.subr.bf16.mxu0 0
  %491 = vmatpush1.bf16.msra.mxu0 %v457
  %492 = vmatprep.subr.bf16.mxu0 0
  %493 = vmatpush1.bf16.msra.mxu0 %v458
  %494 = vmatprep.subr.bf16.mxu0 0
  %495 = vmatpush1.bf16.msra.mxu0 %v459
  %496 = vmatprep.subr.bf16.mxu0 0
  %497 = vmatpush1.bf16.msra.mxu0 %v460
  %498 = vmatprep.subr.bf16.mxu0 0
  %499 = vmatpush1.bf16.msra.mxu0 %v461
  %500 = vmatprep.subr.bf16.mxu0 0
  %501 = vmatpush1.bf16.msra.mxu0 %v462
  %502 = vmatprep.subr.bf16.mxu0 0
  %503 = vmatpush1.bf16.msra.mxu0 %v463
  %504 = vmatprep.subr.bf16.mxu0 0
  %505 = vmatpush1.bf16.msra.mxu0 %v464
  %506 = vmatprep.subr.bf16.mxu0 0
  %507 = vmatpush1.bf16.msra.mxu0 %v465
  %508 = vmatprep.subr.bf16.mxu0 0
  %509 = vmatpush1.bf16.msra.mxu0 %v466
  %510 = vmatprep.subr.bf16.mxu0 0
  %511 = vmatpush1.bf16.msra.mxu0 %v467
  %512 = vmatprep.subr.bf16.mxu0 0
  %513 = vmatpush1.bf16.msra.mxu0 %v468
  %514 = vmatprep.subr.bf16.mxu0 0
  %515 = vmatpush1.bf16.msra.mxu0 %v469
  %516 = vmatprep.subr.bf16.mxu0 0
  %517 = vmatpush1.bf16.msra.mxu0 %v470
  %518 = vmatprep.subr.bf16.mxu0 0
  %519 = vmatpush1.bf16.msra.mxu0 %v471
  %520 = vmatprep.mubr.bf16.mxu0 %v349
  %521 = vmatmul.mubr.bf16.gmra.mrb[0].mxu0 %v348
  %v522 = vpop.f32.mrb[0].mxu0
  %v523 = vadd.f32 %v391, %v522
  %v524 = vpop.f32.mrb[0].mxu0
  %v525 = vpop.f32.mrb[0].mxu0
  %v526 = vadd.f32 %v391, %v525
  %v527 = vpop.f32.mrb[0].mxu0
  %528 = vmatprep.mubr.bf16.mxu0 %v351
  %529 = vmatmul.mubr.bf16.gmra.mrb[0].mxu0 %v350
  %v530 = vpop.f32.mrb[0].mxu0
  %v531 = vadd.f32 %v391, %v530
  %v532 = vpop.f32.mrb[0].mxu0
  %v533 = vpop.f32.mrb[0].mxu0
  %v534 = vadd.f32 %v391, %v533
  %v535 = vpop.f32.mrb[0].mxu0
  %536 = vmatprep.mubr.bf16.mxu0 %v353
  %537 = vmatmul.mubr.bf16.gmra.mrb[0].mxu0 %v352
  %v538 = vpop.f32.mrb[0].mxu0
  %v539 = vadd.f32 %v391, %v538
  %v540 = vpop.f32.mrb[0].mxu0
  %v541 = vpop.f32.mrb[0].mxu0
  %v542 = vadd.f32 %v391, %v541
  %v543 = vpop.f32.mrb[0].mxu0
  %544 = vmatprep.mubr.bf16.mxu0 %v355
  %545 = vmatmul.mubr.bf16.gmra.mrb[0].mxu0 %v354
  %v546 = vpop.f32.mrb[0].mxu0
  %v547 = vadd.f32 %v391, %v546
  %v548 = vpop.f32.mrb[0].mxu0
  %v549 = vpop.f32.mrb[0].mxu0
  %v550 = vadd.f32 %v391, %v549
  %v551 = vpop.f32.mrb[0].mxu0
  %552 = vdwg.mxu0
  %v553 = vmax.f32 %v523, 0.0
  %v554 = vmax.f32 %v526, 0.0
  %v555 = vmax.f32 %v531, 0.0
  %v556 = vmax.f32 %v534, 0.0
  %v557 = vmax.f32 %v539, 0.0
  %v558 = vmax.f32 %v542, 0.0
  %v559 = vmax.f32 %v547, 0.0
  %v560 = vmax.f32 %v550, 0.0
  %vm561 = vcmask 523264
  %v562 = vsel %vm561, %v553, 0.0
  %v563 = vsel %vm561, %v554, 0.0
  %v564 = vadd.f32 %v562, %v563
  %v565 = vsel %vm561, %v555, 0.0
  %v566 = vadd.f32 %v564, %v565
  %v567 = vsel %vm561, %v556, 0.0
  %v568 = vadd.f32 %v566, %v567
  %v569 = vsel %vm561, %v557, 0.0
  %v570 = vadd.f32 %v568, %v569
  %v571 = vsel %vm561, %v558, 0.0
  %v572 = vadd.f32 %v570, %v571
  %v573 = vsel %vm561, %v559, 0.0
  %v574 = vadd.f32 %v572, %v573
  %v575 = vsel %vm561, %v560, 0.0
  %v576 = vadd.f32 %v574, %v575
  %v577 = vrot.slane %v576, 4
  %v578 = vadd.f32 %v576, %v577
  %v579 = vrot.slane %v578, 2
  %v580 = vadd.f32 %v578, %v579
  %v581 = vrot.slane %v580, 1
  %v582 = vadd.f32 %v580, %v581
  %v583 = vmul.f32 %v582, 0.015625
  %v584 = vmul.f32 %v553, %v553
  %v585 = vmul.f32 %v554, %v554
  %v586 = vmul.f32 %v555, %v555
  %v587 = vmul.f32 %v556, %v556
  %v588 = vmul.f32 %v557, %v557
  %v589 = vmul.f32 %v558, %v558
  %v590 = vmul.f32 %v559, %v559
  %v591 = vmul.f32 %v560, %v560
  %v592 = vsel %vm561, %v584, 0.0
  %v593 = vsel %vm561, %v585, 0.0
  %v594 = vadd.f32 %v592, %v593
  %v595 = vsel %vm561, %v586, 0.0
  %v596 = vadd.f32 %v594, %v595
  %v597 = vsel %vm561, %v587, 0.0
  %v598 = vadd.f32 %v596, %v597
  %v599 = vsel %vm561, %v588, 0.0
  %v600 = vadd.f32 %v598, %v599
  %v601 = vsel %vm561, %v589, 0.0
  %v602 = vadd.f32 %v600, %v601
  %v603 = vsel %vm561, %v590, 0.0
  %v604 = vadd.f32 %v602, %v603
  %v605 = vsel %vm561, %v591, 0.0
  %v606 = vadd.f32 %v604, %v605
  %v607 = vrot.slane %v606, 4
  %v608 = vadd.f32 %v606, %v607
  %v609 = vrot.slane %v608, 2
  %v610 = vadd.f32 %v608, %v609
  %v611 = vrot.slane %v610, 1
  %v612 = vadd.f32 %v610, %v611
  %v613 = vmul.f32 %v612, 0.015625
  %v614 = vmul.f32 %v583, %v583
  %v615 = vsub.f32 %v613, %v614
  %v616 = vadd.f32 %v615, 1e-05
  %v617 = vrsqrt.pop %v616
  %v618 = vmul.f32 %v617, %v31
  %v619 = vmul.f32 %v583, %v618
  %v620 = vsub.f32 %v32, %v619
  %v621 = vmul.f32 %v618, %v33
  %v622 = vmul.f32 %v620, %v33
  %vm623 = vcmask 516096
  %v624 = vsel %vm623, %v622, 0.0
  %625 = vadd.xlane.f32.xlu0 %v624
  %v626 = vpop.xlane.xlu0 %625
  %s627 = sld [smem:[#allocation2]]
  %v628 = vstv %s627
  %v629 = vadd.f32 %v626, %v628
  %v630 = vlaneseq
  %v631 = vshrl.u32 %v630, 7
  %v632 = vsub.s32 0, %v631
  %v633 = vrot.slane %v621, %v632
  %v634 = vmul.f32 %v553, %v633
  %v635 = vmul.f32 %v554, %v633
  %v636 = vmul.f32 %v555, %v633
  %v637 = vmul.f32 %v556, %v633
  %v638 = vmul.f32 %v557, %v633
  %v639 = vmul.f32 %v558, %v633
  %v640 = vmul.f32 %v559, %v633
  %v641 = vmul.f32 %v560, %v633
  %v642 = vsel %vm561, %v634, 0.0
  %643 = vadd.xlane.f32.xlu0 %v642
  %v644 = vpop.xlane.xlu0 %643
  %v645 = vsel %vm561, %v635, 0.0
  %646 = vadd.xlane.f32.xlu0 %v645
  %v647 = vpop.xlane.xlu0 %646
  %v648 = vsel %vm561, %v636, 0.0
  %649 = vadd.xlane.f32.xlu0 %v648
  %v650 = vpop.xlane.xlu0 %649
  %v651 = vsel %vm561, %v637, 0.0
  %652 = vadd.xlane.f32.xlu0 %v651
  %v653 = vpop.xlane.xlu0 %652
  %v654 = vsel %vm561, %v638, 0.0
  %655 = vadd.xlane.f32.xlu0 %v654
  %v656 = vpop.xlane.xlu0 %655
  %v657 = vsel %vm561, %v639, 0.0
  %658 = vadd.xlane.f32.xlu0 %v657
  %v659 = vpop.xlane.xlu0 %658
  %v660 = vsel %vm561, %v640, 0.0
  %661 = vadd.xlane.f32.xlu0 %v660
  %v662 = vpop.xlane.xlu0 %661
  %v663 = vsel %vm561, %v641, 0.0
  %664 = vadd.xlane.f32.xlu0 %v663
  %v665 = vpop.xlane.xlu0 %664
  %v666 = vlaneseq
  %v667 = vshrl.u32 %v666, 7
  %v668 = vsub.s32 0, %v667
  %v669 = vrot.slane %v629, %v668
  %v670 = vadd.f32 %v644, %v669
  %v671 = vadd.f32 %v647, %v669
  %v672 = vadd.f32 %v650, %v669
  %v673 = vadd.f32 %v653, %v669
  %v674 = vadd.f32 %v656, %v669
  %v675 = vadd.f32 %v659, %v669
  %v676 = vadd.f32 %v662, %v669
  %v677 = vadd.f32 %v665, %v669
  %vm678 = vcmask 7168
  %679 = vst.msk [vmem:[%s6] sm:$0xff] %vm678, %v670
  %680 = vst.msk [vmem:[%s6 + $0x8] sm:$0xff] %vm678, %v671
  %681 = vst.msk [vmem:[%s6 + $0x10] sm:$0xff] %vm678, %v672
  %682 = vst.msk [vmem:[%s6 + $0x18] sm:$0xff] %vm678, %v673
  %683 = vst.msk [vmem:[%s6 + $0x20] sm:$0xff] %vm678, %v674
  %684 = vst.msk [vmem:[%s6 + $0x28] sm:$0xff] %vm678, %v675
  %685 = vst.msk [vmem:[%s6 + $0x30] sm:$0xff] %vm678, %v676
  %686 = vst.msk [vmem:[%s6 + $0x38] sm:$0xff] %vm678, %v677
  // Predicated region
  $region26: #{tpu_custom_call.1} parent=0 // pred_check
    _
  $region27: #{tpu_custom_call.1} parent=0 // pred_check_branch
    %688 = sbr.rel (0) target = $region29
  $region28: #{tpu_custom_call.1} parent=0 // pred_region
    _
  $region29: #{tpu_custom_call.1} parent=0 // pred_fallthru
    _
  // Predicated region
  $region30: #{tpu_custom_call.1} parent=0 // pred_check
    _
  $region31: #{tpu_custom_call.1} parent=0 // pred_check_branch
    %690 = sbr.rel (0) target = $region33
  $region32: #{tpu_custom_call.1} parent=0 // pred_region
    _
  $region33: #{tpu_custom_call.1} parent=0 // pred_fallthru
    _

</llo_original>
